<compile_context>
chip_gen: v7x
topology: tpu7x:2x2x1
jax: 0.10.0
libtpu: 0.0.40
codegen_flags: <defaults>
</compile_context>

<pallas_src>
import functools

import jax
import jax.numpy as jnp
from jax.experimental import pallas as pl
from jax.experimental.pallas import tpu as pltpu

_LANE = 128


def _mlp_kernel(x_ref,
                w1_ref, b1_ref,
                w2_ref, b2_ref,
                w3_ref, b3_ref,
                w4_ref, b4_ref,
                o_ref):
    # Layer 1: Linear + ReLU   (f32 MXU accumulation)
    h = jnp.dot(x_ref[...], w1_ref[...],
                preferred_element_type=jnp.float32) + b1_ref[...]
    h = jnp.maximum(h, 0.0)

    # Layer 2: Linear + ReLU
    h = jnp.dot(h, w2_ref[...],
                preferred_element_type=jnp.float32) + b2_ref[...]
    h = jnp.maximum(h, 0.0)

    # Layer 3: Linear + ReLU
    h = jnp.dot(h, w3_ref[...],
                preferred_element_type=jnp.float32) + b3_ref[...]
    h = jnp.maximum(h, 0.0)

    # Layer 4: Linear (no activation). Output columns are padded to a multiple
    # of 128 (zero weights / zero bias in the pad), so this store is lane-dense.
    y = jnp.dot(h, w4_ref[...],
                preferred_element_type=jnp.float32) + b4_ref[...]
    o_ref[...] = y.astype(o_ref.dtype)


def prepare_params(params):
    """One-time parameter preparation (call once, reuse every forward).

    - Transposes torch-layout (out, in) weights to (in, out).
    - Reshapes biases to (1, out).
    - Zero-pads the final layer's output dim up to a multiple of 128 so the
      kernel's output tile is lane-dense (unmasked stores).
    """
    out_nodes = params["w4"].shape[0]
    out_pad = ((out_nodes + _LANE - 1) // _LANE) * _LANE

    prepped = {
        "w1": params["w1"].T, "b1": params["b1"].reshape(1, -1),
        "w2": params["w2"].T, "b2": params["b2"].reshape(1, -1),
        "w3": params["w3"].T, "b3": params["b3"].reshape(1, -1),
    }
    w4 = params["w4"].T                 # (hidden, out_nodes)
    b4 = params["b4"].reshape(1, -1)    # (1, out_nodes)
    if out_pad != out_nodes:
        w4 = jnp.pad(w4, ((0, 0), (0, out_pad - out_nodes)))
        b4 = jnp.pad(b4, ((0, 0), (0, out_pad - out_nodes)))
    prepped["w4"] = w4
    prepped["b4"] = b4
    return jax.tree_util.tree_map(jnp.asarray, prepped)


def _choose_tile_b(B):
    """Largest sublane-aligned batch tile that divides B and keeps per-step
    VMEM (x tile + padded y tile, double-buffered) in the low-MB range even on
    v7x's 64 MiB VMEM.  Small / irregular batches fall back to one full tile."""
    for t in (1024, 512, 256, 128, 64, 32, 16, 8):
        if B % t == 0:
            return t
    return B  # irregular small batch: single full-array tile


@functools.partial(jax.jit, static_argnames=("out_nodes",))
def linear_regression_model_forward(x, prepped, *, out_nodes):
    """x: (B, input_nodes) f32.  prepped: output of prepare_params."""
    w1, b1 = prepped["w1"], prepped["b1"]
    w2, b2 = prepped["w2"], prepped["b2"]
    w3, b3 = prepped["w3"], prepped["b3"]
    w4, b4 = prepped["w4"], prepped["b4"]

    B, in_nodes = x.shape
    out_pad = w4.shape[1]
    tile_b = _choose_tile_b(B)
    grid = (B // tile_b,)

    # x / y are tiled over the batch grid axis (software-pipelined);
    # weights / biases use a constant block index so they stay VMEM-resident
    # and are only DMA'd once.
    batch_spec = lambda feat: pl.BlockSpec((tile_b, feat), lambda i: (i, 0))
    const_spec = lambda arr: pl.BlockSpec(arr.shape, lambda i: (0, 0))

    y_pad = pl.pallas_call(
        _mlp_kernel,
        out_shape=jax.ShapeDtypeStruct((B, out_pad), jnp.float32),
        grid=grid,
        in_specs=[
            batch_spec(in_nodes),
            const_spec(w1), const_spec(b1),
            const_spec(w2), const_spec(b2),
            const_spec(w3), const_spec(b3),
            const_spec(w4), const_spec(b4),
        ],
        out_specs=batch_spec(out_pad),
        compiler_params=pltpu.CompilerParams(
            # Batch tiles are independent -> megacore-parallel on v7x.
            dimension_semantics=("parallel",),
        ),
    )(x, w1, b1, w2, b2, w3, b3, w4, b4)

    # Strip the lane padding added to the final layer (zero columns).
    if out_pad != out_nodes:
        y_pad = y_pad[:, :out_nodes]
    return y_pad


def init_params(key, input_nodes, hidden_nodes, output_nodes):
    """Deterministic init mimicking nn.Linear's uniform(-1/sqrt(fan_in), ...)."""
    dims = [(hidden_nodes, input_nodes),
            (hidden_nodes, hidden_nodes),
            (hidden_nodes, hidden_nodes),
            (output_nodes, hidden_nodes)]
    params = {}
    for i, (fan_out, fan_in) in enumerate(dims, start=1):
        key, kw, kb = jax.random.split(key, 3)
        bound = 1.0 / (fan_in ** 0.5)
        params[f"w{i}"] = jax.random.uniform(
            kw, (fan_out, fan_in), jnp.float32, minval=-bound, maxval=bound)
        params[f"b{i}"] = jax.random.uniform(
            kb, (fan_out,), jnp.float32, minval=-bound, maxval=bound)
    return params


if __name__ == "__main__":
    input_nodes, hidden_nodes, output_nodes = 16, 32, 4
    batch = 8

    key = jax.random.PRNGKey(0)
    key, kx = jax.random.split(key)
    x = jax.random.normal(kx, (batch, input_nodes), dtype=jnp.float32)

    params = init_params(key, input_nodes, hidden_nodes, output_nodes)

    # One-time parameter prep (transpose + reshape + lane padding).
    prepped = prepare_params(params)

    y = linear_regression_model_forward(x, prepped, out_nodes=output_nodes)
    jax.block_until_ready(y)

    # Reference check in plain JAX using the original torch-layout params.
    def ref(xv, p):
        h = jnp.maximum(xv @ p["w1"].T + p["b1"], 0.0)
        h = jnp.maximum(h @ p["w2"].T + p["b2"], 0.0)
        h = jnp.maximum(h @ p["w3"].T + p["b3"], 0.0)
        return h @ p["w4"].T + p["b4"]

    y_ref = ref(x, params)
    assert y.shape == (batch, output_nodes)
    assert jnp.allclose(y, y_ref, atol=1e-5, rtol=1e-5)

    print("KERNEL_OK")
</pallas_src>

<mosaic_0001>
module attributes {stable_mosaic.version = 11 : i64} {
  func.func @_mlp_kernel(%arg0: i32, %arg1: memref<8x16xf32, #tpu.memory_space<vmem>>, %arg2: memref<16x32xf32, #tpu.memory_space<vmem>>, %arg3: memref<1x32xf32, #tpu.memory_space<vmem>>, %arg4: memref<32x32xf32, #tpu.memory_space<vmem>>, %arg5: memref<1x32xf32, #tpu.memory_space<vmem>>, %arg6: memref<32x32xf32, #tpu.memory_space<vmem>>, %arg7: memref<1x32xf32, #tpu.memory_space<vmem>>, %arg8: memref<32x128xf32, #tpu.memory_space<vmem>>, %arg9: memref<1x128xf32, #tpu.memory_space<vmem>>, %arg10: memref<8x128xf32, #tpu.memory_space<vmem>>) attributes {dimension_semantics = [#tpu.dimension_semantics<parallel>], iteration_bounds = array<i64: 1>, scalar_prefetch = 0 : i64, scratch_operands = 0 : i64, tpu.core_type = #tpu.core_type<tc>, window_params = [{transform_indices = @transform_0, window_bounds = array<i64: 8, 16>}, {pipeline_mode = #tpu.pipeline_mode<synchronous>, transform_indices = @transform_1, window_bounds = array<i64: 16, 32>}, {pipeline_mode = #tpu.pipeline_mode<synchronous>, transform_indices = @transform_2, window_bounds = array<i64: 1, 32>}, {pipeline_mode = #tpu.pipeline_mode<synchronous>, transform_indices = @transform_3, window_bounds = array<i64: 32, 32>}, {pipeline_mode = #tpu.pipeline_mode<synchronous>, transform_indices = @transform_4, window_bounds = array<i64: 1, 32>}, {pipeline_mode = #tpu.pipeline_mode<synchronous>, transform_indices = @transform_5, window_bounds = array<i64: 32, 32>}, {pipeline_mode = #tpu.pipeline_mode<synchronous>, transform_indices = @transform_6, window_bounds = array<i64: 1, 32>}, {pipeline_mode = #tpu.pipeline_mode<synchronous>, transform_indices = @transform_7, window_bounds = array<i64: 32, 128>}, {pipeline_mode = #tpu.pipeline_mode<synchronous>, transform_indices = @transform_8, window_bounds = array<i64: 1, 128>}, {transform_indices = @transform_9, window_bounds = array<i64: 8, 128>}]} {
    %c0 = arith.constant 0 : index
    %c0_0 = arith.constant 0 : index
    %0 = vector.load %arg1[%c0, %c0_0] : memref<8x16xf32, #tpu.memory_space<vmem>>, vector<8x16xf32>
    %c0_1 = arith.constant 0 : index
    %c0_2 = arith.constant 0 : index
    %1 = vector.load %arg2[%c0_1, %c0_2] : memref<16x32xf32, #tpu.memory_space<vmem>>, vector<16x32xf32>
    %cst = arith.constant dense<0.000000e+00> : vector<8x32xf32>
    %2 = tpu.matmul %0, %1, %cst {dimension_numbers = #tpu.dot_dimension_numbers<[1], [0], [0], [1], [0, 0, 1, 1], [], []>} : vector<8x16xf32>, vector<16x32xf32>, vector<8x32xf32> -> vector<8x32xf32>
    %c0_3 = arith.constant 0 : index
    %c0_4 = arith.constant 0 : index
    %3 = vector.load %arg3[%c0_3, %c0_4] : memref<1x32xf32, #tpu.memory_space<vmem>>, vector<1x32xf32>
    %4 = vector.broadcast %3 : vector<1x32xf32> to vector<8x32xf32>
    %5 = arith.addf %2, %4 : vector<8x32xf32>
    %cst_5 = arith.constant 0.000000e+00 : f32
    %6 = vector.broadcast %cst_5 : f32 to vector<8x32xf32>
    %7 = arith.maximumf %5, %6 : vector<8x32xf32>
    %c0_6 = arith.constant 0 : index
    %c0_7 = arith.constant 0 : index
    %8 = vector.load %arg4[%c0_6, %c0_7] : memref<32x32xf32, #tpu.memory_space<vmem>>, vector<32x32xf32>
    %cst_8 = arith.constant dense<0.000000e+00> : vector<8x32xf32>
    %9 = tpu.matmul %7, %8, %cst_8 {dimension_numbers = #tpu.dot_dimension_numbers<[1], [0], [0], [1], [0, 0, 1, 1], [], []>} : vector<8x32xf32>, vector<32x32xf32>, vector<8x32xf32> -> vector<8x32xf32>
    %c0_9 = arith.constant 0 : index
    %c0_10 = arith.constant 0 : index
    %10 = vector.load %arg5[%c0_9, %c0_10] : memref<1x32xf32, #tpu.memory_space<vmem>>, vector<1x32xf32>
    %11 = vector.broadcast %10 : vector<1x32xf32> to vector<8x32xf32>
    %12 = arith.addf %9, %11 : vector<8x32xf32>
    %cst_11 = arith.constant 0.000000e+00 : f32
    %13 = vector.broadcast %cst_11 : f32 to vector<8x32xf32>
    %14 = arith.maximumf %12, %13 : vector<8x32xf32>
    %c0_12 = arith.constant 0 : index
    %c0_13 = arith.constant 0 : index
    %15 = vector.load %arg6[%c0_12, %c0_13] : memref<32x32xf32, #tpu.memory_space<vmem>>, vector<32x32xf32>
    %cst_14 = arith.constant dense<0.000000e+00> : vector<8x32xf32>
    %16 = tpu.matmul %14, %15, %cst_14 {dimension_numbers = #tpu.dot_dimension_numbers<[1], [0], [0], [1], [0, 0, 1, 1], [], []>} : vector<8x32xf32>, vector<32x32xf32>, vector<8x32xf32> -> vector<8x32xf32>
    %c0_15 = arith.constant 0 : index
    %c0_16 = arith.constant 0 : index
    %17 = vector.load %arg7[%c0_15, %c0_16] : memref<1x32xf32, #tpu.memory_space<vmem>>, vector<1x32xf32>
    %18 = vector.broadcast %17 : vector<1x32xf32> to vector<8x32xf32>
    %19 = arith.addf %16, %18 : vector<8x32xf32>
    %cst_17 = arith.constant 0.000000e+00 : f32
    %20 = vector.broadcast %cst_17 : f32 to vector<8x32xf32>
    %21 = arith.maximumf %19, %20 : vector<8x32xf32>
    %c0_18 = arith.constant 0 : index
    %c0_19 = arith.constant 0 : index
    %22 = vector.load %arg8[%c0_18, %c0_19] : memref<32x128xf32, #tpu.memory_space<vmem>>, vector<32x128xf32>
    %cst_20 = arith.constant dense<0.000000e+00> : vector<8x128xf32>
    %23 = tpu.matmul %21, %22, %cst_20 {dimension_numbers = #tpu.dot_dimension_numbers<[1], [0], [0], [1], [0, 0, 1, 1], [], []>} : vector<8x32xf32>, vector<32x128xf32>, vector<8x128xf32> -> vector<8x128xf32>
    %c0_21 = arith.constant 0 : index
    %c0_22 = arith.constant 0 : index
    %24 = vector.load %arg9[%c0_21, %c0_22] : memref<1x128xf32, #tpu.memory_space<vmem>>, vector<1x128xf32>
    %25 = vector.broadcast %24 : vector<1x128xf32> to vector<8x128xf32>
    %26 = arith.addf %23, %25 : vector<8x128xf32>
    %c0_23 = arith.constant 0 : index
    %c0_24 = arith.constant 0 : index
    %27 = vector.load %arg10[%c0_23, %c0_24] : memref<8x128xf32, #tpu.memory_space<vmem>>, vector<8x128xf32>
    tpu.vector_store %arg10[%c0_23, %c0_24], %26 {strides = array<i32>} : memref<8x128xf32, #tpu.memory_space<vmem>>, vector<8x128xf32>,
    return
  }
  func.func @transform_0(%arg0: i32) -> (i32, i32) {
    %c0_i32 = arith.constant 0 : i32
    %c0_i32_0 = arith.constant 0 : i32
    return %arg0, %c0_i32 : i32, i32
  }
  func.func @transform_1(%arg0: i32) -> (i32, i32) {
    %c0_i32 = arith.constant 0 : i32
    %c0_i32_0 = arith.constant 0 : i32
    %c0_i32_1 = arith.constant 0 : i32
    return %c0_i32, %c0_i32_0 : i32, i32
  }
  func.func @transform_2(%arg0: i32) -> (i32, i32) {
    %c0_i32 = arith.constant 0 : i32
    %c0_i32_0 = arith.constant 0 : i32
    %c0_i32_1 = arith.constant 0 : i32
    return %c0_i32, %c0_i32_0 : i32, i32
  }
  func.func @transform_3(%arg0: i32) -> (i32, i32) {
    %c0_i32 = arith.constant 0 : i32
    %c0_i32_0 = arith.constant 0 : i32
    %c0_i32_1 = arith.constant 0 : i32
    return %c0_i32, %c0_i32_0 : i32, i32
  }
  func.func @transform_4(%arg0: i32) -> (i32, i32) {
    %c0_i32 = arith.constant 0 : i32
    %c0_i32_0 = arith.constant 0 : i32
    %c0_i32_1 = arith.constant 0 : i32
    return %c0_i32, %c0_i32_0 : i32, i32
  }
  func.func @transform_5(%arg0: i32) -> (i32, i32) {
    %c0_i32 = arith.constant 0 : i32
    %c0_i32_0 = arith.constant 0 : i32
    %c0_i32_1 = arith.constant 0 : i32
    return %c0_i32, %c0_i32_0 : i32, i32
  }
  func.func @transform_6(%arg0: i32) -> (i32, i32) {
    %c0_i32 = arith.constant 0 : i32
    %c0_i32_0 = arith.constant 0 : i32
    %c0_i32_1 = arith.constant 0 : i32
    return %c0_i32, %c0_i32_0 : i32, i32
  }
  func.func @transform_7(%arg0: i32) -> (i32, i32) {
    %c0_i32 = arith.constant 0 : i32
    %c0_i32_0 = arith.constant 0 : i32
    %c0_i32_1 = arith.constant 0 : i32
    return %c0_i32, %c0_i32_0 : i32, i32
  }
  func.func @transform_8(%arg0: i32) -> (i32, i32) {
    %c0_i32 = arith.constant 0 : i32
    %c0_i32_0 = arith.constant 0 : i32
    %c0_i32_1 = arith.constant 0 : i32
    return %c0_i32, %c0_i32_0 : i32, i32
  }
  func.func @transform_9(%arg0: i32) -> (i32, i32) {
    %c0_i32 = arith.constant 0 : i32
    %c0_i32_0 = arith.constant 0 : i32
    return %arg0, %c0_i32 : i32, i32
  }
}

</mosaic_0001>

<llo_original>
// kernel: linear_regression_model_forward.1
$region0: #{linear_regression_model_forward.1}
  #allocation0 [shape = 'u32[]', space=smem, size = 0x4, offset = 0x4, fixed_abs, tag = 'smem constant byte address 0x4 - core index']
  #allocation1 [shape = 'u32[144,128]{1,0:T(1,128)}', space=vmem, size = 0x12000, scoped, tag = 'internal scratch']
  %s0 = inlined_call_operand.hbm [shape: f32[8,16], index: 0, kind: input, shape index: {}]
  %s1 = inlined_call_operand.vmem [shape: f32[16,32], index: 1, kind: input, shape index: {}]
  %s2 = inlined_call_operand.vmem [shape: f32[1,32], index: 2, kind: input, shape index: {}]
  %s3 = inlined_call_operand.hbm [shape: f32[32,32], index: 3, kind: input, shape index: {}]
  %s4 = inlined_call_operand.vmem [shape: f32[1,32], index: 4, kind: input, shape index: {}]
  %s5 = inlined_call_operand.hbm [shape: f32[32,32], index: 5, kind: input, shape index: {}]
  %s6 = inlined_call_operand.hbm [shape: f32[1,32], index: 6, kind: input, shape index: {}]
  %s7 = inlined_call_operand.hbm [shape: f32[32,128], index: 7, kind: input, shape index: {}]
  %s8 = inlined_call_operand.hbm [shape: f32[1,128], index: 8, kind: input, shape index: {}]
  %s9 = inlined_call_operand.vmem [shape: f32[8,128], index: 9, kind: output, shape index: {}]
  %s10 = sld [smem:[#allocation0]]
  $region70: #{linear_regression_model_forward.1} parent=0
    _
  %s12 = ssub.s32 1, %s10
  %s13 = scalar_select 0, %s12, %s10
  $region1: #{linear_regression_model_forward.1} parent=0
    #allocation2 [shape = 'u8[4096]{0}', space=vmem, size = 0x1000, scoped, tag = 'input window, operand 0, single buffered']
    #allocation3 [shape = 's32[1]{0}', space=sflag, size = 0x4, scoped, tag = 'scoped memory for linear_regression_model_forward.1']
    #allocation4 [shape = 'u8[16384]{0}', space=vmem, size = 0x4000, scoped, tag = 'input window, operand 3, single buffered']
    #allocation5 [shape = 's32[1]{0}', space=sflag, size = 0x4, scoped, tag = 'scoped memory for linear_regression_model_forward.1']
    #allocation6 [shape = 'u8[16384]{0}', space=vmem, size = 0x4000, scoped, tag = 'input window, operand 5, single buffered']
    #allocation7 [shape = 'u8[512]{0}', space=vmem, size = 0x400, scoped, tag = 'input window, operand 6, single buffered']
    #allocation8 [shape = 's32[1]{0}', space=sflag, size = 0x4, scoped, tag = 'scoped memory for linear_regression_model_forward.1']
    #allocation9 [shape = 'u8[16384]{0}', space=vmem, size = 0x4000, scoped, tag = 'input window, operand 7, single buffered']
    #allocation10 [shape = 'u8[512]{0}', space=vmem, size = 0x400, scoped, tag = 'input window, operand 8, single buffered']
    #allocation11 [shape = 's32[1]{0}', space=sflag, size = 0x4, scoped, tag = 'scoped memory for linear_regression_model_forward.1']
    %14 = vsyncpa [#allocation3], 0
    %15 = vsyncpa [#allocation5], 0
    %16 = vsyncpa [#allocation8], 0
    %17 = vsyncpa [#allocation11], 0
    // Predicated region
    $region2: #{linear_regression_model_forward.1} parent=1 // pred_check
      _
    $region3: #{linear_regression_model_forward.1} parent=1 // pred_check_branch
      %19 = sbr.rel (0) target = $region5
    $region4: #{linear_regression_model_forward.1} parent=1 // pred_region
      %s21 = ssub.s32 128, 128
      %22 = vsyncadd [#allocation3], %s21
      %s24 = sshll.u32 [#allocation2], 4
      %s25 = int_to_ptr.vmem [resolvable:$true] %s24
      %27 = dma.hbm_to_vmem [thread:$0]  %s0, 128, %s25, [#allocation3]
    $region5: #{linear_regression_model_forward.1} parent=1 // pred_fallthru
      _
    // Predicated region
    $region6: #{linear_regression_model_forward.1} parent=1 // pred_check
      _
    $region7: #{linear_regression_model_forward.1} parent=1 // pred_check_branch
      %29 = sbr.rel (0) target = $region9
    $region8: #{linear_regression_model_forward.1} parent=1 // pred_region
      _
    $region9: #{linear_regression_model_forward.1} parent=1 // pred_fallthru
      _
    // Predicated region
    $region10: #{linear_regression_model_forward.1} parent=1 // pred_check
      _
    $region11: #{linear_regression_model_forward.1} parent=1 // pred_check_branch
      %31 = sbr.rel (0) target = $region13
    $region12: #{linear_regression_model_forward.1} parent=1 // pred_region
      _
    $region13: #{linear_regression_model_forward.1} parent=1 // pred_fallthru
      _
    // Predicated region
    $region14: #{linear_regression_model_forward.1} parent=1 // pred_check
      _
    $region15: #{linear_regression_model_forward.1} parent=1 // pred_check_branch
      %33 = sbr.rel (0) target = $region17
    $region16: #{linear_regression_model_forward.1} parent=1 // pred_region
      %s35 = ssub.s32 512, 512
      %36 = vsyncadd [#allocation5], %s35
      %s37 = sshll.u32 [#allocation4], 4
      %s38 = int_to_ptr.vmem [resolvable:$true] %s37
      %43 = dma.hbm_to_vmem [thread:$0]  %s3, 512, %s38, [#allocation5], 128, 128, 8
    $region17: #{linear_regression_model_forward.1} parent=1 // pred_fallthru
      _
    // Predicated region
    $region18: #{linear_regression_model_forward.1} parent=1 // pred_check
      _
    $region19: #{linear_regression_model_forward.1} parent=1 // pred_check_branch
      %45 = sbr.rel (0) target = $region21
    $region20: #{linear_regression_model_forward.1} parent=1 // pred_region
      _
    $region21: #{linear_regression_model_forward.1} parent=1 // pred_fallthru
      _
    // Predicated region
    $region22: #{linear_regression_model_forward.1} parent=1 // pred_check
      _
    $region23: #{linear_regression_model_forward.1} parent=1 // pred_check_branch
      %47 = sbr.rel (0) target = $region25
    $region24: #{linear_regression_model_forward.1} parent=1 // pred_region
      %s49 = ssub.s32 512, 512
      %50 = vsyncadd [#allocation5], %s49
      %s51 = sshll.u32 [#allocation6], 4
      %s52 = int_to_ptr.vmem [resolvable:$true] %s51
      %57 = dma.hbm_to_vmem [thread:$0]  %s5, 512, %s52, [#allocation5], 128, 128, 8
    $region25: #{linear_regression_model_forward.1} parent=1 // pred_fallthru
      _
    // Predicated region
    $region26: #{linear_regression_model_forward.1} parent=1 // pred_check
      _
    $region27: #{linear_regression_model_forward.1} parent=1 // pred_check_branch
      %59 = sbr.rel (0) target = $region29
    $region28: #{linear_regression_model_forward.1} parent=1 // pred_region
      %s61 = ssub.s32 16, 16
      %62 = vsyncadd [#allocation8], %s61
      %s64 = sshll.u32 [#allocation7], 4
      %s65 = int_to_ptr.vmem [resolvable:$true] %s64
      %67 = dma.hbm_to_vmem [thread:$0]  %s6, 16, %s65, [#allocation8]
    $region29: #{linear_regression_model_forward.1} parent=1 // pred_fallthru
      _
    // Predicated region
    $region30: #{linear_regression_model_forward.1} parent=1 // pred_check
      _
    $region31: #{linear_regression_model_forward.1} parent=1 // pred_check_branch
      %69 = sbr.rel (0) target = $region33
    $region32: #{linear_regression_model_forward.1} parent=1 // pred_region
      %s71 = ssub.s32 512, 512
      %72 = vsyncadd [#allocation8], %s71
      %s73 = sshll.u32 [#allocation9], 4
      %s74 = int_to_ptr.vmem [resolvable:$true] %s73
      %79 = dma.hbm_to_vmem [thread:$0]  %s7, 512, %s74, [#allocation8], 128, 128, 8
    $region33: #{linear_regression_model_forward.1} parent=1 // pred_fallthru
      _
    // Predicated region
    $region34: #{linear_regression_model_forward.1} parent=1 // pred_check
      _
    $region35: #{linear_regression_model_forward.1} parent=1 // pred_check_branch
      %81 = sbr.rel (0) target = $region37
    $region36: #{linear_regression_model_forward.1} parent=1 // pred_region
      %s83 = ssub.s32 16, 16
      %84 = vsyncadd [#allocation11], %s83
      %s86 = sshll.u32 [#allocation10], 4
      %s87 = int_to_ptr.vmem [resolvable:$true] %s86
      %89 = dma.hbm_to_vmem [thread:$0]  %s8, 16, %s87, [#allocation11]
    $region37: #{linear_regression_model_forward.1} parent=1 // pred_fallthru
      _
    // Predicated region
    $region38: #{linear_regression_model_forward.1} parent=1 // pred_check
      _
    $region39: #{linear_regression_model_forward.1} parent=1 // pred_check_branch
      %91 = sbr.rel (0) target = $region41
    $region40: #{linear_regression_model_forward.1} parent=1 // pred_region
      %92 = dma.done [#allocation3], 128
    $region41: #{linear_regression_model_forward.1} parent=1 // pred_fallthru
      _
    // Predicated region
    $region42: #{linear_regression_model_forward.1} parent=1 // pred_check
      _
    $region43: #{linear_regression_model_forward.1} parent=1 // pred_check_branch
      %94 = sbr.rel (0) target = $region45
    $region44: #{linear_regression_model_forward.1} parent=1 // pred_region
      %95 = dma.done [#allocation5], 512
    $region45: #{linear_regression_model_forward.1} parent=1 // pred_fallthru
      _
    // Predicated region
    $region46: #{linear_regression_model_forward.1} parent=1 // pred_check
      _
    $region47: #{linear_regression_model_forward.1} parent=1 // pred_check_branch
      %97 = sbr.rel (0) target = $region49
    $region48: #{linear_regression_model_forward.1} parent=1 // pred_region
      %98 = dma.done [#allocation5], 512
    $region49: #{linear_regression_model_forward.1} parent=1 // pred_fallthru
      _
    // Predicated region
    $region50: #{linear_regression_model_forward.1} parent=1 // pred_check
      _
    $region51: #{linear_regression_model_forward.1} parent=1 // pred_check_branch
      %100 = sbr.rel (0) target = $region53
    $region52: #{linear_regression_model_forward.1} parent=1 // pred_region
      %101 = dma.done [#allocation8], 16
    $region53: #{linear_regression_model_forward.1} parent=1 // pred_fallthru
      _
    // Predicated region
    $region54: #{linear_regression_model_forward.1} parent=1 // pred_check
      _
    $region55: #{linear_regression_model_forward.1} parent=1 // pred_check_branch
      %103 = sbr.rel (0) target = $region57
    $region56: #{linear_regression_model_forward.1} parent=1 // pred_region
      %104 = dma.done [#allocation8], 512
    $region57: #{linear_regression_model_forward.1} parent=1 // pred_fallthru
      _
    // Predicated region
    $region58: #{linear_regression_model_forward.1} parent=1 // pred_check
      _
    $region59: #{linear_regression_model_forward.1} parent=1 // pred_check_branch
      %106 = sbr.rel (0) target = $region61
    $region60: #{linear_regression_model_forward.1} parent=1 // pred_region
      %107 = dma.done [#allocation11], 16
    $region61: #{linear_regression_model_forward.1} parent=1 // pred_fallthru
      _
    %v108 = vld [vmem:[#allocation2] sm:$0xff]
    %v109 = vld [vmem:[%s1] sm:$0xff]
    %v110 = vld [vmem:[%s1 + $0x8] sm:$0xff]
    %v111 = vld [vmem:[%s2] sm:$0x1]
    %v113 = vlaneseq
    %v114 = vshrl.u32 %v113, 7
    %v115 = vsub.s32 0, %v114
    %v116 = vrot.slane %v111, %v115
    %vm118 = vcmask 130048
    %v120 = vsel %vm118, %v108, 0
    %122 = vmatprep.subr.mxu0 0.0
    %123 = vmatpush1.msra.mxu0 %v109
    %124 = vmatprep.subr.mxu0 0.0
    %125 = vmatpush1.msra.mxu0 %v110
    %126 = vmatprep.subr.mxu0 0.0
    %127 = vmatpush1.msra.mxu0 0.0
    %128 = vmatprep.subr.mxu0 0.0
    %129 = vmatpush1.msra.mxu0 0.0
    %130 = vmatprep.subr.mxu0 0.0
    %131 = vmatpush1.msra.mxu0 0.0
    %132 = vmatprep.subr.mxu0 0.0
    %133 = vmatpush1.msra.mxu0 0.0
    %134 = vmatprep.subr.mxu0 0.0
    %135 = vmatpush1.msra.mxu0 0.0
    %136 = vmatprep.subr.mxu0 0.0
    %137 = vmatpush1.msra.mxu0 0.0
    %138 = vmatprep.subr.mxu0 0.0
    %139 = vmatpush1.msra.mxu0 0.0
    %140 = vmatprep.subr.mxu0 0.0
    %141 = vmatpush1.msra.mxu0 0.0
    %142 = vmatprep.subr.mxu0 0.0
    %143 = vmatpush1.msra.mxu0 0.0
    %144 = vmatprep.subr.mxu0 0.0
    %145 = vmatpush1.msra.mxu0 0.0
    %146 = vmatprep.subr.mxu0 0.0
    %147 = vmatpush1.msra.mxu0 0.0
    %148 = vmatprep.subr.mxu0 0.0
    %149 = vmatpush1.msra.mxu0 0.0
    %150 = vmatprep.subr.mxu0 0.0
    %151 = vmatpush1.msra.mxu0 0.0
    %152 = vmatprep.subr.mxu0 0.0
    %153 = vmatpush1.msra.mxu0 0.0
    %154 = vmatprep.subr.mxu0 0.0
    %155 = vmatpush1.msra.mxu0 0.0
    %156 = vmatprep.subr.mxu0 0.0
    %157 = vmatpush1.msra.mxu0 0.0
    %158 = vmatprep.subr.mxu0 0.0
    %159 = vmatpush1.msra.mxu0 0.0
    %160 = vmatprep.subr.mxu0 0.0
    %161 = vmatpush1.msra.mxu0 0.0
    %162 = vmatprep.subr.mxu0 0.0
    %163 = vmatpush1.msra.mxu0 0.0
    %164 = vmatprep.subr.mxu0 0.0
    %165 = vmatpush1.msra.mxu0 0.0
    %166 = vmatprep.subr.mxu0 0.0
    %167 = vmatpush1.msra.mxu0 0.0
    %168 = vmatprep.subr.mxu0 0.0
    %169 = vmatpush1.msra.mxu0 0.0
    %170 = vmatprep.subr.mxu0 0.0
    %171 = vmatpush1.msra.mxu0 0.0
    %172 = vmatprep.subr.mxu0 0.0
    %173 = vmatpush1.msra.mxu0 0.0
    %174 = vmatprep.subr.mxu0 0.0
    %175 = vmatpush1.msra.mxu0 0.0
    %176 = vmatprep.subr.mxu0 0.0
    %177 = vmatpush1.msra.mxu0 0.0
    %178 = vmatprep.subr.mxu0 0.0
    %179 = vmatpush1.msra.mxu0 0.0
    %180 = vmatprep.subr.mxu0 0.0
    %181 = vmatpush1.msra.mxu0 0.0
    %182 = vmatprep.subr.mxu0 0.0
    %183 = vmatpush1.msra.mxu0 0.0
    %184 = vmatprep.subr.mxu0 0.0
    %185 = vmatpush1.msra.mxu0 0.0
    %186 = vmatprep.mubr.f32.mxu0 0.0
    %187 = vmatmul.mubr.f32.gmra.mrb[0].mxu0 %v120
    %v188 = vpop.f32.mrb[0].mxu0
    %v189 = vadd.f32 %v116, %v188
    %v190 = vpop.f32.mrb[0].mxu0
    %191 = vdwg.mxu0
    %v192 = vmax.f32 %v189, 0.0
    %v193 = vld [vmem:[#allocation4] sm:$0xff]
    %v194 = vld [vmem:[#allocation4 + $0x8] sm:$0xff]
    %v195 = vld [vmem:[#allocation4 + $0x10] sm:$0xff]
    %v196 = vld [vmem:[#allocation4 + $0x18] sm:$0xff]
    %v197 = vld [vmem:[%s4] sm:$0x1]
    %v199 = vlaneseq
    %v200 = vshrl.u32 %v199, 7
    %v201 = vsub.s32 0, %v200
    %v202 = vrot.slane %v197, %v201
    %vm204 = vcmask 261120
    %v206 = vsel %vm204, %v192, 0
    %208 = vmatprep.subr.mxu0 0.0
    %209 = vmatpush1.msra.mxu0 %v193
    %210 = vmatprep.subr.mxu0 0.0
    %211 = vmatpush1.msra.mxu0 %v194
    %212 = vmatprep.subr.mxu0 0.0
    %213 = vmatpush1.msra.mxu0 %v195
    %214 = vmatprep.subr.mxu0 0.0
    %215 = vmatpush1.msra.mxu0 %v196
    %216 = vmatprep.subr.mxu0 0.0
    %217 = vmatpush1.msra.mxu0 0.0
    %218 = vmatprep.subr.mxu0 0.0
    %219 = vmatpush1.msra.mxu0 0.0
    %220 = vmatprep.subr.mxu0 0.0
    %221 = vmatpush1.msra.mxu0 0.0
    %222 = vmatprep.subr.mxu0 0.0
    %223 = vmatpush1.msra.mxu0 0.0
    %224 = vmatprep.subr.mxu0 0.0
    %225 = vmatpush1.msra.mxu0 0.0
    %226 = vmatprep.subr.mxu0 0.0
    %227 = vmatpush1.msra.mxu0 0.0
    %228 = vmatprep.subr.mxu0 0.0
    %229 = vmatpush1.msra.mxu0 0.0
    %230 = vmatprep.subr.mxu0 0.0
    %231 = vmatpush1.msra.mxu0 0.0
    %232 = vmatprep.subr.mxu0 0.0
    %233 = vmatpush1.msra.mxu0 0.0
    %234 = vmatprep.subr.mxu0 0.0
    %235 = vmatpush1.msra.mxu0 0.0
    %236 = vmatprep.subr.mxu0 0.0
    %237 = vmatpush1.msra.mxu0 0.0
    %238 = vmatprep.subr.mxu0 0.0
    %239 = vmatpush1.msra.mxu0 0.0
    %240 = vmatprep.subr.mxu0 0.0
    %241 = vmatpush1.msra.mxu0 0.0
    %242 = vmatprep.subr.mxu0 0.0
    %243 = vmatpush1.msra.mxu0 0.0
    %244 = vmatprep.subr.mxu0 0.0
    %245 = vmatpush1.msra.mxu0 0.0
    %246 = vmatprep.subr.mxu0 0.0
    %247 = vmatpush1.msra.mxu0 0.0
    %248 = vmatprep.subr.mxu0 0.0
    %249 = vmatpush1.msra.mxu0 0.0
    %250 = vmatprep.subr.mxu0 0.0
    %251 = vmatpush1.msra.mxu0 0.0
    %252 = vmatprep.subr.mxu0 0.0
    %253 = vmatpush1.msra.mxu0 0.0
    %254 = vmatprep.subr.mxu0 0.0
    %255 = vmatpush1.msra.mxu0 0.0
    %256 = vmatprep.subr.mxu0 0.0
    %257 = vmatpush1.msra.mxu0 0.0
    %258 = vmatprep.subr.mxu0 0.0
    %259 = vmatpush1.msra.mxu0 0.0
    %260 = vmatprep.subr.mxu0 0.0
    %261 = vmatpush1.msra.mxu0 0.0
    %262 = vmatprep.subr.mxu0 0.0
    %263 = vmatpush1.msra.mxu0 0.0
    %264 = vmatprep.subr.mxu0 0.0
    %265 = vmatpush1.msra.mxu0 0.0
    %266 = vmatprep.subr.mxu0 0.0
    %267 = vmatpush1.msra.mxu0 0.0
    %268 = vmatprep.subr.mxu0 0.0
    %269 = vmatpush1.msra.mxu0 0.0
    %270 = vmatprep.subr.mxu0 0.0
    %271 = vmatpush1.msra.mxu0 0.0
    %272 = vmatprep.mubr.f32.mxu0 0.0
    %273 = vmatmul.mubr.f32.gmra.mrb[0].mxu0 %v206
    %v274 = vpop.f32.mrb[0].mxu0
    %v275 = vadd.f32 %v202, %v274
    %v276 = vpop.f32.mrb[0].mxu0
    %277 = vdwg.mxu0
    %v278 = vmax.f32 %v275, 0.0
    %v279 = vld [vmem:[#allocation6] sm:$0xff]
    %v280 = vld [vmem:[#allocation6 + $0x8] sm:$0xff]
    %v281 = vld [vmem:[#allocation6 + $0x10] sm:$0xff]
    %v282 = vld [vmem:[#allocation6 + $0x18] sm:$0xff]
    %v283 = vld [vmem:[#allocation7] sm:$0x1]
    %v285 = vlaneseq
    %v286 = vshrl.u32 %v285, 7
    %v287 = vsub.s32 0, %v286
    %v288 = vrot.slane %v283, %v287
    %v291 = vsel %vm204, %v278, 0
    %293 = vmatprep.subr.mxu0 0.0
    %294 = vmatpush1.msra.mxu0 %v279
    %295 = vmatprep.subr.mxu0 0.0
    %296 = vmatpush1.msra.mxu0 %v280
    %297 = vmatprep.subr.mxu0 0.0
    %298 = vmatpush1.msra.mxu0 %v281
    %299 = vmatprep.subr.mxu0 0.0
    %300 = vmatpush1.msra.mxu0 %v282
    %301 = vmatprep.subr.mxu0 0.0
    %302 = vmatpush1.msra.mxu0 0.0
    %303 = vmatprep.subr.mxu0 0.0
    %304 = vmatpush1.msra.mxu0 0.0
    %305 = vmatprep.subr.mxu0 0.0
    %306 = vmatpush1.msra.mxu0 0.0
    %307 = vmatprep.subr.mxu0 0.0
    %308 = vmatpush1.msra.mxu0 0.0
    %309 = vmatprep.subr.mxu0 0.0
    %310 = vmatpush1.msra.mxu0 0.0
    %311 = vmatprep.subr.mxu0 0.0
    %312 = vmatpush1.msra.mxu0 0.0
    %313 = vmatprep.subr.mxu0 0.0
    %314 = vmatpush1.msra.mxu0 0.0
    %315 = vmatprep.subr.mxu0 0.0
    %316 = vmatpush1.msra.mxu0 0.0
    %317 = vmatprep.subr.mxu0 0.0
    %318 = vmatpush1.msra.mxu0 0.0
    %319 = vmatprep.subr.mxu0 0.0
    %320 = vmatpush1.msra.mxu0 0.0
    %321 = vmatprep.subr.mxu0 0.0
    %322 = vmatpush1.msra.mxu0 0.0
    %323 = vmatprep.subr.mxu0 0.0
    %324 = vmatpush1.msra.mxu0 0.0
    %325 = vmatprep.subr.mxu0 0.0
    %326 = vmatpush1.msra.mxu0 0.0
    %327 = vmatprep.subr.mxu0 0.0
    %328 = vmatpush1.msra.mxu0 0.0
    %329 = vmatprep.subr.mxu0 0.0
    %330 = vmatpush1.msra.mxu0 0.0
    %331 = vmatprep.subr.mxu0 0.0
    %332 = vmatpush1.msra.mxu0 0.0
    %333 = vmatprep.subr.mxu0 0.0
    %334 = vmatpush1.msra.mxu0 0.0
    %335 = vmatprep.subr.mxu0 0.0
    %336 = vmatpush1.msra.mxu0 0.0
    %337 = vmatprep.subr.mxu0 0.0
    %338 = vmatpush1.msra.mxu0 0.0
    %339 = vmatprep.subr.mxu0 0.0
    %340 = vmatpush1.msra.mxu0 0.0
    %341 = vmatprep.subr.mxu0 0.0
    %342 = vmatpush1.msra.mxu0 0.0
    %343 = vmatprep.subr.mxu0 0.0
    %344 = vmatpush1.msra.mxu0 0.0
    %345 = vmatprep.subr.mxu0 0.0
    %346 = vmatpush1.msra.mxu0 0.0
    %347 = vmatprep.subr.mxu0 0.0
    %348 = vmatpush1.msra.mxu0 0.0
    %349 = vmatprep.subr.mxu0 0.0
    %350 = vmatpush1.msra.mxu0 0.0
    %351 = vmatprep.subr.mxu0 0.0
    %352 = vmatpush1.msra.mxu0 0.0
    %353 = vmatprep.subr.mxu0 0.0
    %354 = vmatpush1.msra.mxu0 0.0
    %355 = vmatprep.subr.mxu0 0.0
    %356 = vmatpush1.msra.mxu0 0.0
    %357 = vmatprep.mubr.f32.mxu0 0.0
    %358 = vmatmul.mubr.f32.gmra.mrb[0].mxu0 %v291
    %v359 = vpop.f32.mrb[0].mxu0
    %v360 = vadd.f32 %v288, %v359
    %v361 = vpop.f32.mrb[0].mxu0
    %362 = vdwg.mxu0
    %v363 = vmax.f32 %v360, 0.0
    %v364 = vld [vmem:[#allocation9] sm:$0xff]
    %v365 = vld [vmem:[#allocation9 + $0x8] sm:$0xff]
    %v366 = vld [vmem:[#allocation9 + $0x10] sm:$0xff]
    %v367 = vld [vmem:[#allocation9 + $0x18] sm:$0xff]
    %v368 = vld [vmem:[#allocation10] sm:$0x1]
    %v370 = vlaneseq
    %v371 = vshrl.u32 %v370, 7
    %v372 = vsub.s32 0, %v371
    %v373 = vrot.slane %v368, %v372
    %v376 = vsel %vm204, %v363, 0
    %378 = vmatprep.subr.mxu0 0.0
    %379 = vmatpush1.msra.mxu0 %v364
    %380 = vmatprep.subr.mxu0 0.0
    %381 = vmatpush1.msra.mxu0 %v365
    %382 = vmatprep.subr.mxu0 0.0
    %383 = vmatpush1.msra.mxu0 %v366
    %384 = vmatprep.subr.mxu0 0.0
    %385 = vmatpush1.msra.mxu0 %v367
    %386 = vmatprep.subr.mxu0 0.0
    %387 = vmatpush1.msra.mxu0 0.0
    %388 = vmatprep.subr.mxu0 0.0
    %389 = vmatpush1.msra.mxu0 0.0
    %390 = vmatprep.subr.mxu0 0.0
    %391 = vmatpush1.msra.mxu0 0.0
    %392 = vmatprep.subr.mxu0 0.0
    %393 = vmatpush1.msra.mxu0 0.0
    %394 = vmatprep.subr.mxu0 0.0
    %395 = vmatpush1.msra.mxu0 0.0
    %396 = vmatprep.subr.mxu0 0.0
    %397 = vmatpush1.msra.mxu0 0.0
    %398 = vmatprep.subr.mxu0 0.0
    %399 = vmatpush1.msra.mxu0 0.0
    %400 = vmatprep.subr.mxu0 0.0
    %401 = vmatpush1.msra.mxu0 0.0
    %402 = vmatprep.subr.mxu0 0.0
    %403 = vmatpush1.msra.mxu0 0.0
    %404 = vmatprep.subr.mxu0 0.0
    %405 = vmatpush1.msra.mxu0 0.0
    %406 = vmatprep.subr.mxu0 0.0
    %407 = vmatpush1.msra.mxu0 0.0
    %408 = vmatprep.subr.mxu0 0.0
    %409 = vmatpush1.msra.mxu0 0.0
    %410 = vmatprep.subr.mxu0 0.0
    %411 = vmatpush1.msra.mxu0 0.0
    %412 = vmatprep.subr.mxu0 0.0
    %413 = vmatpush1.msra.mxu0 0.0
    %414 = vmatprep.subr.mxu0 0.0
    %415 = vmatpush1.msra.mxu0 0.0
    %416 = vmatprep.subr.mxu0 0.0
    %417 = vmatpush1.msra.mxu0 0.0
    %418 = vmatprep.subr.mxu0 0.0
    %419 = vmatpush1.msra.mxu0 0.0
    %420 = vmatprep.subr.mxu0 0.0
    %421 = vmatpush1.msra.mxu0 0.0
    %422 = vmatprep.subr.mxu0 0.0
    %423 = vmatpush1.msra.mxu0 0.0
    %424 = vmatprep.subr.mxu0 0.0
    %425 = vmatpush1.msra.mxu0 0.0
    %426 = vmatprep.subr.mxu0 0.0
    %427 = vmatpush1.msra.mxu0 0.0
    %428 = vmatprep.subr.mxu0 0.0
    %429 = vmatpush1.msra.mxu0 0.0
    %430 = vmatprep.subr.mxu0 0.0
    %431 = vmatpush1.msra.mxu0 0.0
    %432 = vmatprep.subr.mxu0 0.0
    %433 = vmatpush1.msra.mxu0 0.0
    %434 = vmatprep.subr.mxu0 0.0
    %435 = vmatpush1.msra.mxu0 0.0
    %436 = vmatprep.subr.mxu0 0.0
    %437 = vmatpush1.msra.mxu0 0.0
    %438 = vmatprep.subr.mxu0 0.0
    %439 = vmatpush1.msra.mxu0 0.0
    %440 = vmatprep.subr.mxu0 0.0
    %441 = vmatpush1.msra.mxu0 0.0
    %442 = vmatprep.mubr.f32.mxu0 0.0
    %443 = vmatmul.mubr.f32.gmra.mrb[0].mxu0 %v376
    %v444 = vpop.f32.mrb[0].mxu0
    %v445 = vadd.f32 %v373, %v444
    %v446 = vpop.f32.mrb[0].mxu0
    %447 = vdwg.mxu0
    %448 = vst [vmem:[%s9] sm:$0xff] %v445
    // Predicated region
    $region62: #{linear_regression_model_forward.1} parent=1 // pred_check
      _
    $region63: #{linear_regression_model_forward.1} parent=1 // pred_check_branch
      %450 = sbr.rel (0) target = $region65
    $region64: #{linear_regression_model_forward.1} parent=1 // pred_region
      _
    $region65: #{linear_regression_model_forward.1} parent=1 // pred_fallthru
      _
    // Predicated region
    $region66: #{linear_regression_model_forward.1} parent=1 // pred_check
      _
    $region67: #{linear_regression_model_forward.1} parent=1 // pred_check_branch
      %452 = sbr.rel (0) target = $region69
    $region68: #{linear_regression_model_forward.1} parent=1 // pred_region
      _
    $region69: #{linear_regression_model_forward.1} parent=1 // pred_fallthru
      _
    %453 = vsyncpa [#allocation3], 1
    %454 = vsyncpa [#allocation5], 1
    %455 = vsyncpa [#allocation8], 1
    %456 = vsyncpa [#allocation11], 1

</llo_original>
